<compile_context>
chip_gen: v5e
topology: v5e:2x2
jax: 0.10.0
libtpu: 0.0.40
codegen_flags: <defaults>
</compile_context>

<pallas_src>
import math

import jax
import jax.numpy as jnp
from jax.experimental import pallas as pl
from jax.experimental.pallas import tpu as pltpu


# ---------------------------------------------------------------------------
# Kernel
# ---------------------------------------------------------------------------
def pos_encoding_kernel(x_ref, pe_ref, out_ref):
    # x_ref:  [TL, B, D]   (seq tile, batch, d_model)
    # pe_ref: [TL, 1, D]   (layout-matched seq tile of the sin/cos table)
    # Stride-0 sublane broadcast over the batch axis; single fused add.
    out_ref[...] = x_ref[...] + pe_ref[...]


# ---------------------------------------------------------------------------
# Host-side helpers
# ---------------------------------------------------------------------------
def make_pe_table(max_len, d_model, dtype=jnp.float32):
    """Replicates the PyTorch buffer construction (d_model assumed even)."""
    position = jnp.arange(max_len, dtype=jnp.float32)[:, None]          # [L, 1]
    div_term = jnp.exp(
        jnp.arange(0, d_model, 2, dtype=jnp.float32)
        * (-math.log(10000.0) / d_model)
    )                                                                    # [D/2]
    angles = position * div_term                                         # [L, D/2]
    pe = jnp.zeros((max_len, d_model), dtype=jnp.float32)
    pe = pe.at[:, 0::2].set(jnp.sin(angles))
    pe = pe.at[:, 1::2].set(jnp.cos(angles))
    return pe.astype(dtype)


def _round_up(v, m):
    return -(-v // m) * m


def _choose_tile_len(L, B, D, itemsize, *, vmem_budget_bytes=16 * 1024 * 1024,
                     target_steps=8):
    """Derive the seq-tile length from a VMEM byte budget.

    Per seq row the pipeline holds (double-buffered): one x input row and one
    output row (each rB*rD elements after sublane/lane padding) plus one pe row
    ((1, D) pads to 8 sublanes).
    """
    rB = _round_up(B, 8)       # batch sits on the sublane axis
    rD = _round_up(D, 128)     # d_model sits on the lane axis
    row_bytes = 2 * (2 * rB + 8) * rD * itemsize
    tl_vmem = max(1, vmem_budget_bytes // row_bytes)

    # Keep ~target_steps grid steps when the sequence allows it: gives the DMA
    # pipeline work to overlap and lets v7x's two TensorCores split the
    # "parallel" seq axis — but never shrink tiles below 8 rows for it
    # (per-grid-step overhead ~0.35 us would dominate).
    tl_split = max(8, -(-L // target_steps))

    tl = min(L, tl_vmem, tl_split)
    if 8 <= tl < L:
        tl = (tl // 8) * 8
    return max(1, tl)


def positional_encoding_forward(x, pe_table, *,
                                vmem_budget_bytes=16 * 1024 * 1024,
                                donate_x=True):
    """x: [seq_len, batch, d_model]; pe_table: [max_len, d_model].
    Returns x + pe[:seq_len] (eval-mode forward, dropout is identity).
    If donate_x is True the output aliases x's HBM buffer (x is consumed)."""
    L, B, D = x.shape

    # Mirror `self.pe[:x.size(0), :]`: slice, cast to the activation dtype
    # (bf16 path moves half the bytes, no mixed-precision add), and present as
    # [L, 1, D] so its block layout matches x's (batch=sublane, d_model=lane).
    pe = pe_table[:L].astype(x.dtype).reshape(L, 1, D)

    TL = _choose_tile_len(L, B, D, x.dtype.itemsize,
                          vmem_budget_bytes=vmem_budget_bytes)
    grid = (pl.cdiv(L, TL),)

    return pl.pallas_call(
        pos_encoding_kernel,
        out_shape=jax.ShapeDtypeStruct((L, B, D), x.dtype),
        grid_spec=pltpu.PrefetchScalarGridSpec(
            num_scalar_prefetch=0,
            grid=grid,
            in_specs=[
                pl.BlockSpec((TL, B, D), lambda i: (i, 0, 0)),   # x seq-tile
                pl.BlockSpec((TL, 1, D), lambda i: (i, 0, 0)),   # pe seq-tile
            ],
            out_specs=pl.BlockSpec((TL, B, D), lambda i: (i, 0, 0)),
        ),
        compiler_params=pltpu.CompilerParams(
            dimension_semantics=("parallel",),     # seq tiles are independent
            vmem_limit_bytes=32 * 1024 * 1024,     # budget + headroom, all gens
        ),
        input_output_aliases=({0: 0} if donate_x else {}),
    )(x, pe)


# ---------------------------------------------------------------------------
# Test
# ---------------------------------------------------------------------------
if __name__ == "__main__":
    # Small, module-consistent shapes (seq-first layout).
    seq_len = 16
    batch = 2
    d_model = 32
    max_len = 450

    key = jax.random.PRNGKey(0)
    x = jax.random.normal(key, (seq_len, batch, d_model), dtype=jnp.float32)
    x_dtype = x.dtype

    pe_table = make_pe_table(max_len, d_model)

    # Compute the pure-JAX reference BEFORE the kernel: the kernel donates /
    # aliases x's buffer (input_output_aliases), so x must not be read after.
    ref = x + pe_table[:seq_len][:, None, :]
    ref = jax.block_until_ready(ref)

    out = positional_encoding_forward(x, pe_table)
    out = jax.block_until_ready(out)

    assert out.shape == (seq_len, batch, d_model)
    assert out.dtype == x_dtype
    assert jnp.allclose(out, ref, atol=1e-6, rtol=1e-6)

    print("KERNEL_OK")
</pallas_src>

<mosaic_0001>
module attributes {stable_mosaic.version = 11 : i64} {
  func.func @pos_encoding_kernel(%arg0: i32, %arg1: memref<8x2x32xf32, #tpu.memory_space<vmem>>, %arg2: memref<8x1x32xf32, #tpu.memory_space<vmem>>, %arg3: memref<8x2x32xf32, #tpu.memory_space<vmem>>) attributes {dimension_semantics = [#tpu.dimension_semantics<parallel>], iteration_bounds = array<i64: 2>, scalar_prefetch = 0 : i64, scratch_operands = 0 : i64, tpu.core_type = #tpu.core_type<tc>, window_params = [{transform_indices = @transform_0, window_bounds = array<i64: 8, 2, 32>}, {transform_indices = @transform_1, window_bounds = array<i64: 8, 1, 32>}, {transform_indices = @transform_2, window_bounds = array<i64: 8, 2, 32>}]} {
    %c0 = arith.constant 0 : index
    %c0_0 = arith.constant 0 : index
    %c0_1 = arith.constant 0 : index
    %0 = vector.load %arg1[%c0, %c0_0, %c0_1] : memref<8x2x32xf32, #tpu.memory_space<vmem>>, vector<8x2x32xf32>
    %c0_2 = arith.constant 0 : index
    %c0_3 = arith.constant 0 : index
    %c0_4 = arith.constant 0 : index
    %1 = vector.load %arg2[%c0_2, %c0_3, %c0_4] : memref<8x1x32xf32, #tpu.memory_space<vmem>>, vector<8x1x32xf32>
    %2 = vector.broadcast %1 : vector<8x1x32xf32> to vector<8x2x32xf32>
    %3 = arith.addf %0, %2 : vector<8x2x32xf32>
    %c0_5 = arith.constant 0 : index
    %c0_6 = arith.constant 0 : index
    %c0_7 = arith.constant 0 : index
    %4 = vector.load %arg3[%c0_5, %c0_6, %c0_7] : memref<8x2x32xf32, #tpu.memory_space<vmem>>, vector<8x2x32xf32>
    tpu.vector_store %arg3[%c0_5, %c0_6, %c0_7], %3 {strides = array<i32>} : memref<8x2x32xf32, #tpu.memory_space<vmem>>, vector<8x2x32xf32>,
    return
  }
  func.func @transform_0(%arg0: i32) -> (i32, i32, i32) {
    %c0_i32 = arith.constant 0 : i32
    %c0_i32_0 = arith.constant 0 : i32
    %c0_i32_1 = arith.constant 0 : i32
    return %arg0, %c0_i32, %c0_i32_0 : i32, i32, i32
  }
  func.func @transform_1(%arg0: i32) -> (i32, i32, i32) {
    %c0_i32 = arith.constant 0 : i32
    %c0_i32_0 = arith.constant 0 : i32
    %c0_i32_1 = arith.constant 0 : i32
    return %arg0, %c0_i32, %c0_i32_0 : i32, i32, i32
  }
  func.func @transform_2(%arg0: i32) -> (i32, i32, i32) {
    %c0_i32 = arith.constant 0 : i32
    %c0_i32_0 = arith.constant 0 : i32
    %c0_i32_1 = arith.constant 0 : i32
    return %arg0, %c0_i32, %c0_i32_0 : i32, i32, i32
  }
}

</mosaic_0001>

<llo_original>
// kernel: tpu_custom_call.1
$region0: #{tpu_custom_call.1}
  #allocation0 [shape = 'u32[]', space=smem, size = 0x4, offset = 0x4, fixed_abs, tag = 'smem constant byte address 0x4 - core index']
  #allocation1 [shape = 'u32[72,128]{1,0:T(1,128)}', space=vmem, size = 0x9000, scoped, tag = 'internal scratch']
  %s0 = inlined_call_operand.hbm [shape: f32[16,2,32], index: 0, kind: input, shape index: {}, may-alias: {0,2}]
  %s1 = inlined_call_operand.vmem [shape: f32[16,1,32], index: 1, kind: input, shape index: {}]
  %s2 = inlined_call_operand.hbm [shape: f32[16,2,32], index: 2, kind: output, shape index: {}, may-alias: {0,2}]
  %s3 = sld [smem:[#allocation0]]
  $region45: #{tpu_custom_call.1} parent=0
    _
  %s5 = ssub.s32 1, %s3
  %s6 = scalar_select 0, %s5, %s3
  $region1: #{tpu_custom_call.1} parent=0
    #allocation2 [shape = 'u8[16384]{0}', space=vmem, size = 0x4000, scoped, tag = 'input window, operand 0']
    #allocation3 [shape = 's32[2]{0}', space=sflag, size = 0x8, scoped, tag = 'scoped memory for tpu_custom_call.1']
    #allocation4 [shape = 's32[2]{0}', space=sflag, size = 0x8, scoped, tag = 'scoped memory for tpu_custom_call.1']
    #allocation5 [shape = 'u8[16384]{0}', space=vmem, size = 0x4000, scoped, tag = 'output window, operand 0']
    %7 = vsyncpa [#allocation3], 0
    %s8 = scalar_lea.sflag [#allocation3], 1
    %9 = vsyncpa %s8, 0
    %10 = vsyncpa [#allocation4], 0
    %s11 = scalar_lea.sflag [#allocation4], 1
    %12 = vsyncpa %s11, 0
    loop: start=0, step=1, limit=4
    $region2: #{tpu_custom_call.1} parent=1 // loop_pre_header
      _
    $region3: #{tpu_custom_call.1} parent=1 // loop_header
      %s14 = sphi 0, %s18
      %p15 = scmp.ge.s32.totalorder %s14, 4
      %s24 = sphi 0, %s26
      %s27 = sphi 0, %s24
      %s28 = sphi 0, %s27
      %s44 = sphi 0, %s28
      %s50 = sphi 0, %s52
      %s53 = sphi 0, %s50
      %s54 = sphi 0, %s53
      %s70 = sphi 0, %s54
      %s76 = sphi 0, %s78
      %s79 = sphi 0, %s76
      %s80 = sphi 0, %s79
      %s96 = sphi 0, %s80
    $region4: #{tpu_custom_call.1} parent=1 // loop_header_branch
      %17 = sbr.rel (%p15) target = $region8
    $region5: #{tpu_custom_call.1} parent=1 // loop_body
      %s19 = ssub.s32 %s14, 1
      %s20 = ssub.s32 %s14, 2
      %s21 = sadd.s32 %s14, 1
      %s22 = ssub.s32 %s14, %s21
      %p23 = scmp.eq.s32.totalorder %s22, 0
      %s25 = sadd.s32 %s24, 1
      %s26 = scalar_select %p23, %s24, %s25
      %p29 = pneg %p23
      %p30 = scmp.eq.s32.totalorder %s14, 1
      %p31 = por %p29, %p30
      %p32 = scmp.ne.s32.totalorder %s24, %s27
      %p33 = scmp.eq.s32.totalorder %s14, 0
      %p34 = por %p32, %p33
      %p35 = scmp.ne.s32.totalorder %s24, %s27
      %p36 = scmp.eq.s32.totalorder %s19, 1
      %p37 = por %p35, %p36
      %p38 = scmp.ne.s32.totalorder %s27, %s28
      %p39 = scmp.eq.s32.totalorder %s19, 0
      %p40 = por %p38, %p39
      %p41 = scmp.ne.s32.totalorder %s27, %s28
      %p42 = scmp.eq.s32.totalorder %s20, 1
      %p43 = por %p41, %p42
      %p45 = scmp.ne.s32.totalorder %s28, %s44
      %p46 = scmp.eq.s32.totalorder %s20, 0
      %p47 = por %p45, %p46
      %s48 = ssub.s32 %s14, %s21
      %p49 = scmp.eq.s32.totalorder %s48, 0
      %s51 = sadd.s32 %s50, 1
      %s52 = scalar_select %p49, %s50, %s51
      %p55 = pneg %p49
      %p56 = scmp.eq.s32.totalorder %s14, 1
      %p57 = por %p55, %p56
      %p58 = scmp.ne.s32.totalorder %s50, %s53
      %p59 = scmp.eq.s32.totalorder %s14, 0
      %p60 = por %p58, %p59
      %p61 = scmp.ne.s32.totalorder %s50, %s53
      %p62 = scmp.eq.s32.totalorder %s19, 1
      %p63 = por %p61, %p62
      %p64 = scmp.ne.s32.totalorder %s53, %s54
      %p65 = scmp.eq.s32.totalorder %s19, 0
      %p66 = por %p64, %p65
      %p67 = scmp.ne.s32.totalorder %s53, %s54
      %p68 = scmp.eq.s32.totalorder %s20, 1
      %p69 = por %p67, %p68
      %p71 = scmp.ne.s32.totalorder %s54, %s70
      %p72 = scmp.eq.s32.totalorder %s20, 0
      %p73 = por %p71, %p72
      %s74 = ssub.s32 %s14, %s21
      %p75 = scmp.eq.s32.totalorder %s74, 0
      %s77 = sadd.s32 %s76, 1
      %s78 = scalar_select %p75, %s76, %s77
      %p81 = pneg %p75
      %p82 = scmp.eq.s32.totalorder %s14, 1
      %p83 = por %p81, %p82
      %p84 = scmp.ne.s32.totalorder %s76, %s79
      %p85 = scmp.eq.s32.totalorder %s14, 0
      %p86 = por %p84, %p85
      %p87 = scmp.ne.s32.totalorder %s76, %s79
      %p88 = scmp.eq.s32.totalorder %s19, 1
      %p89 = por %p87, %p88
      %p90 = scmp.ne.s32.totalorder %s79, %s80
      %p91 = scmp.eq.s32.totalorder %s19, 0
      %p92 = por %p90, %p91
      %p93 = scmp.ne.s32.totalorder %s79, %s80
      %p94 = scmp.eq.s32.totalorder %s20, 1
      %p95 = por %p93, %p94
      %p97 = scmp.ne.s32.totalorder %s80, %s96
      %p98 = scmp.eq.s32.totalorder %s20, 0
      %p99 = por %p97, %p98
      %p100 = scmp.le.s32.totalorder 1, %s14
      %p101 = scmp.lt.s32.totalorder %s14, 3
      %p102 = pnand %p100, %p101
      %p103 = pneg %p102
      // Predicated region
      $region9: #{tpu_custom_call.1} parent=5 // pred_check
        _
      $region10: #{tpu_custom_call.1} parent=5 // pred_check_branch
        %105 = sbr.rel (%p102) target = $region12
      $region11: #{tpu_custom_call.1} parent=5 // pred_region
        %s106 = ssub.s32 %s14, 1
      $region12: #{tpu_custom_call.1} parent=5 // pred_fallthru
        _
      %p107 = scmp.lt.s32.totalorder %s14, 2
      // Predicated region
      $region13: #{tpu_custom_call.1} parent=5 // pred_check
        %p108 = pneg %p107
      $region14: #{tpu_custom_call.1} parent=5 // pred_check_branch
        %110 = sbr.rel (%p108) target = $region16
      $region15: #{tpu_custom_call.1} parent=5 // pred_region
        // Predicated region
        $region17: #{tpu_custom_call.1} parent=15 // pred_check
          %p111 = pneg %p34
        $region18: #{tpu_custom_call.1} parent=15 // pred_check_branch
          %113 = sbr.rel (%p111) target = $region20
        $region19: #{tpu_custom_call.1} parent=15 // pred_region
          %s114 = sand.u32 %s24, 1
          %s115 = scalar_lea.sflag [#allocation3], %s114
          %s116 = sand.u32 %s24, 1
          %s117 = smul.addr %s116, 16
          %s118 = scalar_lea.vmem [#allocation2], %s117
          %s119 = smul.u32 8, %s14
          %121 = vsyncadd %s115, 0
          %s122 = smul.addr %s119, 2
          %s123 = scalar_lea.hbm %s0, %s122
          %s124 = sshll.u32 %s123, 4
          %s125 = int_to_ptr.hbm [resolvable:$true] %s124
          %s126 = sshll.u32 %s118, 4
          %s127 = int_to_ptr.vmem [resolvable:$true] %s126
          %132 = dma.hbm_to_vmem [thread:$0]  %s125, 256, %s127, %s115, 32, 32, 2
        $region20: #{tpu_custom_call.1} parent=15 // pred_fallthru
          _
        // Predicated region
        $region21: #{tpu_custom_call.1} parent=15 // pred_check
          %p133 = pneg %p60
        $region22: #{tpu_custom_call.1} parent=15 // pred_check_branch
          %135 = sbr.rel (%p133) target = $region24
        $region23: #{tpu_custom_call.1} parent=15 // pred_region
          %s136 = smul.u32 8, %s14
          %p137 = scmp.lt.s32.totalorder %s136, 15
          %s138 = scalar_select %p137, %s136, 15
          %s139 = scalar_lea.vmem %s1, %s138
          %s140 = smul.u32 8, %s14
        $region24: #{tpu_custom_call.1} parent=15 // pred_fallthru
          _
      $region16: #{tpu_custom_call.1} parent=5 // pred_fallthru
        _
      %p141 = scmp.le.s32.totalorder 1, %s14
      %p142 = scmp.lt.s32.totalorder %s14, 3
      %p143 = pnand %p141, %p142
      %p144 = pneg %p143
      // Predicated region
      $region25: #{tpu_custom_call.1} parent=5 // pred_check
        _
      $region26: #{tpu_custom_call.1} parent=5 // pred_check_branch
        %146 = sbr.rel (%p143) target = $region28
      $region27: #{tpu_custom_call.1} parent=5 // pred_region
        %s147 = ssub.s32 %s14, 1
        %s148 = sand.u32 %s27, 1
        %s149 = scalar_lea.sflag [#allocation3], %s148
        %s150 = sand.u32 %s27, 1
        %s151 = smul.addr %s150, 16
        %s152 = scalar_lea.vmem [#allocation2], %s151
        // Predicated region
        $region29: #{tpu_custom_call.1} parent=27 // pred_check
          %p153 = pneg %p40
        $region30: #{tpu_custom_call.1} parent=27 // pred_check_branch
          %155 = sbr.rel (%p153) target = $region32
        $region31: #{tpu_custom_call.1} parent=27 // pred_region
          %157 = dma.done %s149, 256
        $region32: #{tpu_custom_call.1} parent=27 // pred_fallthru
          _
        %s158 = sand.u32 %s27, 1
        %s159 = scalar_lea.sflag [#allocation3], %s158
        %s160 = sand.u32 %s27, 1
        %s161 = smul.addr %s160, 16
        %s162 = scalar_lea.vmem [#allocation2], %s161
        %p163 = pneg %p40
        %p164 = pneg %p37
        %s165 = smul.u32 8, %s19
        %p166 = scmp.lt.s32.totalorder %s165, 15
        %s167 = scalar_select %p166, %s165, 15
        %s168 = scalar_lea.vmem %s1, %s167
        %p169 = pneg %p66
        %p170 = pneg %p63
        %p171 = pneg %p92
        %p172 = pneg %p89
        %s173 = sand.u32 %s79, 1
        %s174 = scalar_lea.sflag [#allocation4], %s173
        %s175 = sand.u32 %s79, 1
        %s176 = smul.addr %s175, 16
        %s177 = scalar_lea.vmem [#allocation5], %s176
        %s178 = smul.u32 8, %s19
        %s179 = smul.u32 8, %s19
        %p180 = scmp.lt.s32.totalorder %s179, 15
        %s181 = scalar_select %p180, %s179, 15
        %s182 = scalar_lea.vmem %s1, %s181
        %s183 = smul.u32 8, %s19
        %s184 = smul.u32 8, %s19
        %v185 = vld [vmem:[%s152] sm:$0x3]
        %v186 = vld [vmem:[%s152 + $0x2] sm:$0x3]
        %v187 = vld [vmem:[%s152 + $0x4] sm:$0x3]
        %v188 = vld [vmem:[%s152 + $0x6] sm:$0x3]
        %v189 = vld [vmem:[%s152 + $0x8] sm:$0x3]
        %v190 = vld [vmem:[%s152 + $0xa] sm:$0x3]
        %v191 = vld [vmem:[%s152 + $0xc] sm:$0x3]
        %v192 = vld [vmem:[%s152 + $0xe] sm:$0x3]
        %v193 = vld [vmem:[%s182] sm:$0x1]
        %v194 = vld [vmem:[%s182 + $0x1] sm:$0x1]
        %v195 = vld [vmem:[%s182 + $0x2] sm:$0x1]
        %v196 = vld [vmem:[%s182 + $0x3] sm:$0x1]
        %v197 = vld [vmem:[%s182 + $0x4] sm:$0x1]
        %v198 = vld [vmem:[%s182 + $0x5] sm:$0x1]
        %v199 = vld [vmem:[%s182 + $0x6] sm:$0x1]
        %v200 = vld [vmem:[%s182 + $0x7] sm:$0x1]
        %v209 = vperm.slane %v193, 0
        %v210 = vperm.slane %v194, 0
        %v211 = vperm.slane %v195, 0
        %v212 = vperm.slane %v196, 0
        %v213 = vperm.slane %v197, 0
        %v214 = vperm.slane %v198, 0
        %v215 = vperm.slane %v199, 0
        %v216 = vperm.slane %v200, 0
        %v225 = vadd.f32 %v185, %v209
        %v226 = vadd.f32 %v186, %v210
        %v227 = vadd.f32 %v187, %v211
        %v228 = vadd.f32 %v188, %v212
        %v229 = vadd.f32 %v189, %v213
        %v230 = vadd.f32 %v190, %v214
        %v231 = vadd.f32 %v191, %v215
        %v232 = vadd.f32 %v192, %v216
        %vm233 = vcmask 254976
        %234 = vst.msk [vmem:[%s177] sm:$0x3] %vm233, %v225
        %235 = vst.msk [vmem:[%s177 + $0x2] sm:$0x3] %vm233, %v226
        %236 = vst.msk [vmem:[%s177 + $0x4] sm:$0x3] %vm233, %v227
        %237 = vst.msk [vmem:[%s177 + $0x6] sm:$0x3] %vm233, %v228
        %238 = vst.msk [vmem:[%s177 + $0x8] sm:$0x3] %vm233, %v229
        %239 = vst.msk [vmem:[%s177 + $0xa] sm:$0x3] %vm233, %v230
        %240 = vst.msk [vmem:[%s177 + $0xc] sm:$0x3] %vm233, %v231
        %241 = vst.msk [vmem:[%s177 + $0xe] sm:$0x3] %vm233, %v232
        %s242 = sand.u32 %s79, 1
        %s243 = scalar_lea.sflag [#allocation4], %s242
        %s244 = sand.u32 %s79, 1
        %s245 = smul.addr %s244, 16
        %s246 = scalar_lea.vmem [#allocation5], %s245
        // Predicated region
        $region33: #{tpu_custom_call.1} parent=27 // pred_check
          %p247 = pneg %p89
        $region34: #{tpu_custom_call.1} parent=27 // pred_check_branch
          %249 = sbr.rel (%p247) target = $region36
        $region35: #{tpu_custom_call.1} parent=27 // pred_region
          %s250 = smul.u32 8, %s19
          %252 = vsyncadd %s243, 0
          %s253 = smul.addr %s250, 2
          %s254 = scalar_lea.hbm %s2, %s253
          %s255 = sshll.u32 %s246, 4
          %s256 = int_to_ptr.vmem [resolvable:$true] %s255
          %s257 = sshll.u32 %s254, 4
          %s258 = int_to_ptr.hbm [resolvable:$true] %s257
          %263 = dma.vmem_to_hbm [thread:$0]  %s256, 256, %s258, %s243, 32, 32, 2
        $region36: #{tpu_custom_call.1} parent=27 // pred_fallthru
          _
      $region28: #{tpu_custom_call.1} parent=5 // pred_fallthru
        _
      %p264 = scmp.le.s32.totalorder 2, %s14
      // Predicated region
      $region37: #{tpu_custom_call.1} parent=5 // pred_check
        %p265 = pneg %p264
      $region38: #{tpu_custom_call.1} parent=5 // pred_check_branch
        %267 = sbr.rel (%p265) target = $region40
      $region39: #{tpu_custom_call.1} parent=5 // pred_region
        %s268 = ssub.s32 %s14, 2
        // Predicated region
        $region41: #{tpu_custom_call.1} parent=39 // pred_check
          %p269 = pneg %p95
        $region42: #{tpu_custom_call.1} parent=39 // pred_check_branch
          %271 = sbr.rel (%p269) target = $region44
        $region43: #{tpu_custom_call.1} parent=39 // pred_region
          %s272 = sand.u32 %s80, 1
          %s273 = scalar_lea.sflag [#allocation4], %s272
          %s274 = sand.u32 %s80, 1
          %s275 = smul.addr %s274, 16
          %s276 = scalar_lea.vmem [#allocation5], %s275
          %278 = dma.done %s273, 256
        $region44: #{tpu_custom_call.1} parent=39 // pred_fallthru
          _
      $region40: #{tpu_custom_call.1} parent=5 // pred_fallthru
        _
    $region6: #{tpu_custom_call.1} parent=1 // loop_footer
      %s18 = sadd.s32 1, %s14
    $region7: #{tpu_custom_call.1} parent=1 // loop_footer_branch
      %13 = sbr.rel target = $region3
    $region8: #{tpu_custom_call.1} parent=1 // loop_exit
      _
    %279 = vsyncpa [#allocation3], 1
    %s280 = scalar_lea.sflag [#allocation3], 1
    %281 = vsyncpa %s280, 1
    %282 = vsyncpa [#allocation4], 1
    %s283 = scalar_lea.sflag [#allocation4], 1
    %284 = vsyncpa %s283, 1

</llo_original>
